<compile_context>
chip_gen: v5e
topology: v5e:2x2
jax: 0.10.0
libtpu: 0.0.40
codegen_flags: <defaults>
</compile_context>

<pallas_src>
import jax
import jax.numpy as jnp
from jax.experimental import pallas as pl
from jax.experimental.pallas import tpu as pltpu

INPUT_SIZE = 7   # fixed by forward(): 7 scalar sensor readings
OUT_SIZE = 2
_SMALL_BATCH_XLA_CUTOFF = 512   # below this, launch/DMA setup dwarfs 14 FLOPs/row


def _avoid_kernel(p_ref, x_ref, o_ref):
    """p_ref: SMEM f32[16], p[2*i+j] = W[i,j] (i<7), p[14+j] = b[j]
       x_ref: VMEM (7, tn)  feature-major sensor block (lane-dense rows)
       o_ref: VMEM (2, tn)  lane-dense output block
    """
    x = x_ref[...]                                        # (7, tn)
    for j in range(OUT_SIZE):
        # scalar-weight * lane-dense-row broadcast-FMAs (VPU), scalar bias splat
        acc = p_ref[j] * x[0:1, :] + p_ref[14 + j]        # (1, tn)
        for i in range(1, INPUT_SIZE):
            acc = acc + p_ref[2 * i + j] * x[i:i + 1, :]
        o_ref[j:j + 1, :] = jnp.tanh(acc)


def pack_avoid_params(w1, b1, w2, b2):
    """One-time parameter collapse + flatten (hoisted out of the hot path).

    w1: (7, H)  input_layer weight, stored (in, out)
    b1: (H,)    input_layer bias
    w2: (H, 2)  output_layer weight, stored (in, out)
    b2: (2,)    output_layer bias
    Returns f32[16]: [W[0,0], W[0,1], ..., W[6,0], W[6,1], b[0], b[1]],
    where W = W1 @ W2 (7,2) and b = b1 @ W2 + b2 (2,).
    """
    w1 = jnp.asarray(w1, jnp.float32)
    b1 = jnp.asarray(b1, jnp.float32)
    w2 = jnp.asarray(w2, jnp.float32)
    b2 = jnp.asarray(b2, jnp.float32)
    w = w1 @ w2                  # (7, 2)
    b = b1 @ w2 + b2             # (2,)
    return jnp.concatenate([w.reshape(-1), b]).astype(jnp.float32)  # (16,)


def _choose_tile(batch, block_cols):
    """Lane-tile width: big tiles to amortize grid-step overhead, but keep the
    grid length >= 2 on moderate/large batches so v7x megacore splits rows."""
    if batch <= 256:
        return batch                           # single full-extent block
    half = -(-batch // 2)                      # ceil(batch / 2) -> >= 2 blocks
    half = ((half + 127) // 128) * 128         # lane tiles: multiple of 128
    return min(block_cols, half)


def avoid_model_forward(x, packed_params, *, block_cols=8192,
                        feature_major=False, force_pallas=False):
    """Forward pass of AvoidModel (tanh(output_layer(input_layer(x)))).

    x: (B, 7) or (7,) samples (AoS), or (7, B) when feature_major=True (SoA,
       the preferred producer-side layout).
    packed_params: f32[16] from pack_avoid_params.
    Returns (B, 2) / (2,) for AoS input, or (2, B) for feature-major input.
    """
    packed_params = jnp.asarray(packed_params, jnp.float32)
    x = jnp.asarray(x, jnp.float32)

    if feature_major:
        assert x.ndim == 2 and x.shape[0] == INPUT_SIZE
        squeeze = False
        B = x.shape[1]
        x_t = x                                          # already (7, B)
    else:
        squeeze = (x.ndim == 1)
        if squeeze:
            x = x.reshape(1, INPUT_SIZE)
        B = x.shape[0]
        x_t = None                                       # transposed lazily

    # Small batches (incl. the per-control-step single sample): fused XLA path.
    if B <= _SMALL_BATCH_XLA_CUTOFF and not force_pallas:
        w = packed_params[:14].reshape(INPUT_SIZE, OUT_SIZE)
        b = packed_params[14:16]
        if feature_major:
            return jnp.tanh(w.T @ x + b[:, None])        # (2, B)
        y = jnp.tanh(x @ w + b)                          # (B, 2)
        return y[0] if squeeze else y

    if x_t is None:
        x_t = x.T                                        # (7, B) wrapper transpose

    tn = _choose_tile(B, block_cols)
    grid = (pl.cdiv(B, tn),)

    out_t = pl.pallas_call(
        _avoid_kernel,
        out_shape=jax.ShapeDtypeStruct((OUT_SIZE, B), jnp.float32),
        grid=grid,
        in_specs=[
            pl.BlockSpec(memory_space=pltpu.MemorySpace.SMEM),    # f32[16] params
            pl.BlockSpec((INPUT_SIZE, tn), lambda i: (0, i)),     # (7, tn) SoA block
        ],
        out_specs=pl.BlockSpec((OUT_SIZE, tn), lambda i: (0, i)),  # (2, tn) lane-dense
        compiler_params=pltpu.CompilerParams(
            dimension_semantics=("parallel",)),                    # v7x: 2 TCs share tiles
    )(packed_params, x_t)

    if feature_major:
        return out_t                                     # (2, B)
    out = out_t.T                                        # (B, 2)
    return out[0] if squeeze else out


def init_params(key, input_size, hidden_size):
    """Deterministic init mimicking nn.Linear (uniform +/- 1/sqrt(fan_in)).
    Weights stored pre-transposed as (in, out) for the row-vector layout."""
    k1, k2, k3, k4 = jax.random.split(key, 4)
    bound1 = 1.0 / jnp.sqrt(input_size)
    bound2 = 1.0 / jnp.sqrt(hidden_size)
    w1 = jax.random.uniform(k1, (input_size, hidden_size),
                            jnp.float32, -bound1, bound1)
    b1 = jax.random.uniform(k2, (hidden_size,), jnp.float32, -bound1, bound1)
    w2 = jax.random.uniform(k3, (hidden_size, OUT_SIZE),
                            jnp.float32, -bound2, bound2)
    b2 = jax.random.uniform(k4, (OUT_SIZE,), jnp.float32, -bound2, bound2)
    return w1, b1, w2, b2


if __name__ == "__main__":
    HIDDEN_SIZE = 32

    key = jax.random.PRNGKey(0)
    pkey, xkey, xkey2 = jax.random.split(key, 3)
    w1, b1, w2, b2 = init_params(pkey, INPUT_SIZE, HIDDEN_SIZE)

    # One-time parameter collapse + packing (never re-prepared per call).
    packed = pack_avoid_params(w1, b1, w2, b2)

    def reference(x2d):  # uncollapsed two-layer reference, original semantics
        return jnp.tanh((x2d @ w1 + b1) @ w2 + b2)

    # --- main Pallas path: feature-major input, 2 lane tiles, partial last tile
    B = 2048 + 61
    x_big = jax.random.uniform(xkey, (B, INPUT_SIZE), jnp.float32)
    y_fm = jax.block_until_ready(
        avoid_model_forward(x_big.T, packed, feature_major=True))
    assert y_fm.shape == (OUT_SIZE, B)
    assert jnp.allclose(y_fm.T, reference(x_big), atol=3e-5)

    # --- AoS convenience path (wrapper transposes in/out), same Pallas kernel
    y_aos = jax.block_until_ready(avoid_model_forward(x_big, packed))
    assert y_aos.shape == (B, OUT_SIZE)
    assert jnp.allclose(y_aos, reference(x_big), atol=3e-5)

    # --- single-sample call mirroring the original forward() signature
    #     (small-B dispatch uses the fused XLA path; identical semantics)
    (left, right, center, robot_found, floor_color,
     distance_to_wall, distance_to_robot) = [float(v) for v in x_big[0]]
    x_vec = jnp.array([left, right, center, robot_found, floor_color,
                       distance_to_wall, distance_to_robot], jnp.float32)
    y_one = jax.block_until_ready(avoid_model_forward(x_vec, packed))
    assert y_one.shape == (OUT_SIZE,)
    assert jnp.allclose(y_one, reference(x_vec.reshape(1, -1))[0], atol=3e-5)

    # --- tiny batch forced through the Pallas kernel (full-extent block path)
    x_small = jax.random.uniform(xkey2, (8, INPUT_SIZE), jnp.float32)
    y_small = jax.block_until_ready(
        avoid_model_forward(x_small, packed, force_pallas=True))
    assert y_small.shape == (8, OUT_SIZE)
    assert jnp.allclose(y_small, reference(x_small), atol=3e-5)

    print("KERNEL_OK")
</pallas_src>

<mosaic_0001>
module attributes {stable_mosaic.version = 11 : i64} {
  func.func @_avoid_kernel(%arg0: i32, %arg1: memref<16xf32, #tpu.memory_space<smem>>, %arg2: memref<7x1152xf32, #tpu.memory_space<vmem>>, %arg3: memref<2x1152xf32, #tpu.memory_space<vmem>>) attributes {dimension_semantics = [#tpu.dimension_semantics<parallel>], iteration_bounds = array<i64: 2>, scalar_prefetch = 0 : i64, scratch_operands = 0 : i64, tpu.core_type = #tpu.core_type<tc>, window_params = [{transform_indices = @transform_0, window_bounds = array<i64: 16>}, {transform_indices = @transform_1, window_bounds = array<i64: 7, 1152>}, {transform_indices = @transform_2, window_bounds = array<i64: 2, 1152>}]} {
    %c0 = arith.constant 0 : index
    %c0_0 = arith.constant 0 : index
    %0 = vector.load %arg2[%c0, %c0_0] : memref<7x1152xf32, #tpu.memory_space<vmem>>, vector<7x1152xf32>
    %c0_1 = arith.constant 0 : index
    %1 = memref.load %arg1[%c0_1] : memref<16xf32, #tpu.memory_space<smem>>
    %2 = vector.extract_strided_slice %0 {offsets = [0, 0], sizes = [1, 1152], strides = [1, 1]} : vector<7x1152xf32> to vector<1x1152xf32>
    %3 = vector.broadcast %1 : f32 to vector<1x1152xf32>
    %4 = arith.mulf %3, %2 : vector<1x1152xf32>
    %c14 = arith.constant 14 : index
    %5 = memref.load %arg1[%c14] : memref<16xf32, #tpu.memory_space<smem>>
    %6 = vector.broadcast %5 : f32 to vector<1x1152xf32>
    %7 = arith.addf %4, %6 : vector<1x1152xf32>
    %c2 = arith.constant 2 : index
    %8 = memref.load %arg1[%c2] : memref<16xf32, #tpu.memory_space<smem>>
    %9 = vector.extract_strided_slice %0 {offsets = [1, 0], sizes = [1, 1152], strides = [1, 1]} : vector<7x1152xf32> to vector<1x1152xf32>
    %10 = vector.broadcast %8 : f32 to vector<1x1152xf32>
    %11 = arith.mulf %10, %9 : vector<1x1152xf32>
    %12 = arith.addf %7, %11 : vector<1x1152xf32>
    %c4 = arith.constant 4 : index
    %13 = memref.load %arg1[%c4] : memref<16xf32, #tpu.memory_space<smem>>
    %14 = vector.extract_strided_slice %0 {offsets = [2, 0], sizes = [1, 1152], strides = [1, 1]} : vector<7x1152xf32> to vector<1x1152xf32>
    %15 = vector.broadcast %13 : f32 to vector<1x1152xf32>
    %16 = arith.mulf %15, %14 : vector<1x1152xf32>
    %17 = arith.addf %12, %16 : vector<1x1152xf32>
    %c6 = arith.constant 6 : index
    %18 = memref.load %arg1[%c6] : memref<16xf32, #tpu.memory_space<smem>>
    %19 = vector.extract_strided_slice %0 {offsets = [3, 0], sizes = [1, 1152], strides = [1, 1]} : vector<7x1152xf32> to vector<1x1152xf32>
    %20 = vector.broadcast %18 : f32 to vector<1x1152xf32>
    %21 = arith.mulf %20, %19 : vector<1x1152xf32>
    %22 = arith.addf %17, %21 : vector<1x1152xf32>
    %c8 = arith.constant 8 : index
    %23 = memref.load %arg1[%c8] : memref<16xf32, #tpu.memory_space<smem>>
    %24 = vector.extract_strided_slice %0 {offsets = [4, 0], sizes = [1, 1152], strides = [1, 1]} : vector<7x1152xf32> to vector<1x1152xf32>
    %25 = vector.broadcast %23 : f32 to vector<1x1152xf32>
    %26 = arith.mulf %25, %24 : vector<1x1152xf32>
    %27 = arith.addf %22, %26 : vector<1x1152xf32>
    %c10 = arith.constant 10 : index
    %28 = memref.load %arg1[%c10] : memref<16xf32, #tpu.memory_space<smem>>
    %29 = vector.extract_strided_slice %0 {offsets = [5, 0], sizes = [1, 1152], strides = [1, 1]} : vector<7x1152xf32> to vector<1x1152xf32>
    %30 = vector.broadcast %28 : f32 to vector<1x1152xf32>
    %31 = arith.mulf %30, %29 : vector<1x1152xf32>
    %32 = arith.addf %27, %31 : vector<1x1152xf32>
    %c12 = arith.constant 12 : index
    %33 = memref.load %arg1[%c12] : memref<16xf32, #tpu.memory_space<smem>>
    %34 = vector.extract_strided_slice %0 {offsets = [6, 0], sizes = [1, 1152], strides = [1, 1]} : vector<7x1152xf32> to vector<1x1152xf32>
    %35 = vector.broadcast %33 : f32 to vector<1x1152xf32>
    %36 = arith.mulf %35, %34 : vector<1x1152xf32>
    %37 = arith.addf %32, %36 : vector<1x1152xf32>
    %38 = math.tanh %37 : vector<1x1152xf32>
    %c0_2 = arith.constant 0 : index
    %c0_3 = arith.constant 0 : index
    %39 = vector.load %arg3[%c0_2, %c0_3] : memref<2x1152xf32, #tpu.memory_space<vmem>>, vector<1x1152xf32>
    tpu.vector_store %arg3[%c0_2, %c0_3], %38 {strides = array<i32>} : memref<2x1152xf32, #tpu.memory_space<vmem>>, vector<1x1152xf32>,
    %c1 = arith.constant 1 : index
    %40 = memref.load %arg1[%c1] : memref<16xf32, #tpu.memory_space<smem>>
    %41 = vector.extract_strided_slice %0 {offsets = [0, 0], sizes = [1, 1152], strides = [1, 1]} : vector<7x1152xf32> to vector<1x1152xf32>
    %42 = vector.broadcast %40 : f32 to vector<1x1152xf32>
    %43 = arith.mulf %42, %41 : vector<1x1152xf32>
    %c15 = arith.constant 15 : index
    %44 = memref.load %arg1[%c15] : memref<16xf32, #tpu.memory_space<smem>>
    %45 = vector.broadcast %44 : f32 to vector<1x1152xf32>
    %46 = arith.addf %43, %45 : vector<1x1152xf32>
    %c3 = arith.constant 3 : index
    %47 = memref.load %arg1[%c3] : memref<16xf32, #tpu.memory_space<smem>>
    %48 = vector.extract_strided_slice %0 {offsets = [1, 0], sizes = [1, 1152], strides = [1, 1]} : vector<7x1152xf32> to vector<1x1152xf32>
    %49 = vector.broadcast %47 : f32 to vector<1x1152xf32>
    %50 = arith.mulf %49, %48 : vector<1x1152xf32>
    %51 = arith.addf %46, %50 : vector<1x1152xf32>
    %c5 = arith.constant 5 : index
    %52 = memref.load %arg1[%c5] : memref<16xf32, #tpu.memory_space<smem>>
    %53 = vector.extract_strided_slice %0 {offsets = [2, 0], sizes = [1, 1152], strides = [1, 1]} : vector<7x1152xf32> to vector<1x1152xf32>
    %54 = vector.broadcast %52 : f32 to vector<1x1152xf32>
    %55 = arith.mulf %54, %53 : vector<1x1152xf32>
    %56 = arith.addf %51, %55 : vector<1x1152xf32>
    %c7 = arith.constant 7 : index
    %57 = memref.load %arg1[%c7] : memref<16xf32, #tpu.memory_space<smem>>
    %58 = vector.extract_strided_slice %0 {offsets = [3, 0], sizes = [1, 1152], strides = [1, 1]} : vector<7x1152xf32> to vector<1x1152xf32>
    %59 = vector.broadcast %57 : f32 to vector<1x1152xf32>
    %60 = arith.mulf %59, %58 : vector<1x1152xf32>
    %61 = arith.addf %56, %60 : vector<1x1152xf32>
    %c9 = arith.constant 9 : index
    %62 = memref.load %arg1[%c9] : memref<16xf32, #tpu.memory_space<smem>>
    %63 = vector.extract_strided_slice %0 {offsets = [4, 0], sizes = [1, 1152], strides = [1, 1]} : vector<7x1152xf32> to vector<1x1152xf32>
    %64 = vector.broadcast %62 : f32 to vector<1x1152xf32>
    %65 = arith.mulf %64, %63 : vector<1x1152xf32>
    %66 = arith.addf %61, %65 : vector<1x1152xf32>
    %c11 = arith.constant 11 : index
    %67 = memref.load %arg1[%c11] : memref<16xf32, #tpu.memory_space<smem>>
    %68 = vector.extract_strided_slice %0 {offsets = [5, 0], sizes = [1, 1152], strides = [1, 1]} : vector<7x1152xf32> to vector<1x1152xf32>
    %69 = vector.broadcast %67 : f32 to vector<1x1152xf32>
    %70 = arith.mulf %69, %68 : vector<1x1152xf32>
    %71 = arith.addf %66, %70 : vector<1x1152xf32>
    %c13 = arith.constant 13 : index
    %72 = memref.load %arg1[%c13] : memref<16xf32, #tpu.memory_space<smem>>
    %73 = vector.extract_strided_slice %0 {offsets = [6, 0], sizes = [1, 1152], strides = [1, 1]} : vector<7x1152xf32> to vector<1x1152xf32>
    %74 = vector.broadcast %72 : f32 to vector<1x1152xf32>
    %75 = arith.mulf %74, %73 : vector<1x1152xf32>
    %76 = arith.addf %71, %75 : vector<1x1152xf32>
    %77 = math.tanh %76 : vector<1x1152xf32>
    %c1_4 = arith.constant 1 : index
    %c0_5 = arith.constant 0 : index
    %78 = vector.load %arg3[%c1_4, %c0_5] : memref<2x1152xf32, #tpu.memory_space<vmem>>, vector<1x1152xf32>
    tpu.vector_store %arg3[%c1_4, %c0_5], %77 {strides = array<i32>} : memref<2x1152xf32, #tpu.memory_space<vmem>>, vector<1x1152xf32>,
    return
  }
  func.func @transform_0(%arg0: i32) -> i32 {
    %c0_i32 = arith.constant 0 : i32
    %c0_i32_0 = arith.constant 0 : i32
    return %c0_i32 : i32
  }
  func.func @transform_1(%arg0: i32) -> (i32, i32) {
    %c0_i32 = arith.constant 0 : i32
    %c0_i32_0 = arith.constant 0 : i32
    return %c0_i32, %arg0 : i32, i32
  }
  func.func @transform_2(%arg0: i32) -> (i32, i32) {
    %c0_i32 = arith.constant 0 : i32
    %c0_i32_0 = arith.constant 0 : i32
    return %c0_i32, %arg0 : i32, i32
  }
}

</mosaic_0001>

<llo_original>
// kernel: tpu_custom_call.1
$region0: #{tpu_custom_call.1}
  #allocation0 [shape = 'u32[]', space=smem, size = 0x4, offset = 0x4, fixed_abs, tag = 'smem constant byte address 0x4 - core index']
  #allocation1 [shape = 'u32[72,128]{1,0:T(1,128)}', space=vmem, size = 0x9000, scoped, tag = 'internal scratch']
  %s0 = inlined_call_operand.hbm [shape: f32[16], index: 0, kind: input, shape index: {}]
  %s1 = inlined_call_operand.hbm [shape: f32[7,2109], index: 1, kind: input, shape index: {}]
  %s2 = inlined_call_operand.hbm [shape: f32[2,2109], index: 2, kind: output, shape index: {}]
  %s3 = sld [smem:[#allocation0]]
  $region49: #{tpu_custom_call.1} parent=0
    _
  %s5 = ssub.s32 1, %s3
  %s6 = scalar_select 0, %s5, %s3
  $region1: #{tpu_custom_call.1} parent=0
    #allocation2 [shape = 'u8[512]{0}', space=smem, size = 0x200, scoped, tag = 'input window, operand 0, single buffered']
    #allocation3 [shape = 's32[2]{0}', space=sflag, size = 0x8, scoped, tag = 'scoped memory for tpu_custom_call.1']
    #allocation4 [shape = 's32[2]{0}', space=sflag, size = 0x8, scoped, tag = 'scoped memory for tpu_custom_call.1']
    #allocation5 [shape = 's32[2]{0}', space=sflag, size = 0x8, scoped, tag = 'scoped memory for tpu_custom_call.1']
    #allocation6 [shape = 'u8[73728]{0}', space=vmem, size = 0x12000, scoped, tag = 'input window, operand 1']
    #allocation7 [shape = 'u8[18432]{0}', space=vmem, size = 0x4800, scoped, tag = 'output window, operand 0']
    %7 = vsyncpa [#allocation5], 0
    %8 = vsyncpa [#allocation3], 0
    %s9 = scalar_lea.sflag [#allocation3], 1
    %10 = vsyncpa %s9, 0
    %11 = vsyncpa [#allocation4], 0
    %s12 = scalar_lea.sflag [#allocation4], 1
    %13 = vsyncpa %s12, 0
    loop: start=0, step=1, limit=4
    $region2: #{tpu_custom_call.1} parent=1 // loop_pre_header
      _
    $region3: #{tpu_custom_call.1} parent=1 // loop_header
      %s15 = sphi 0, %s19
      %p16 = scmp.ge.s32.totalorder %s15, 4
      %s23 = sphi 0, %s23
      %s25 = sphi 0, %s23
      %s26 = sphi 0, %s25
      %s40 = sphi 0, %s26
      %s46 = sphi 0, %s48
      %s49 = sphi 0, %s46
      %s50 = sphi 0, %s49
      %s66 = sphi 0, %s50
      %s72 = sphi 0, %s74
      %s75 = sphi 0, %s72
      %s76 = sphi 0, %s75
      %s92 = sphi 0, %s76
    $region4: #{tpu_custom_call.1} parent=1 // loop_header_branch
      %18 = sbr.rel (%p16) target = $region8
    $region5: #{tpu_custom_call.1} parent=1 // loop_body
      %s20 = ssub.s32 %s15, 1
      %s21 = ssub.s32 %s15, 2
      %s22 = sadd.s32 %s15, 1
      %s24 = sadd.s32 %s23, 1
      %p27 = scmp.eq.s32.totalorder %s15, 1
      %p28 = scmp.ne.s32.totalorder %s23, %s25
      %p29 = scmp.eq.s32.totalorder %s15, 0
      %p30 = por %p28, %p29
      %p31 = scmp.ne.s32.totalorder %s23, %s25
      %p32 = scmp.eq.s32.totalorder %s20, 1
      %p33 = por %p31, %p32
      %p34 = scmp.ne.s32.totalorder %s25, %s26
      %p35 = scmp.eq.s32.totalorder %s20, 0
      %p36 = por %p34, %p35
      %p37 = scmp.ne.s32.totalorder %s25, %s26
      %p38 = scmp.eq.s32.totalorder %s21, 1
      %p39 = por %p37, %p38
      %p41 = scmp.ne.s32.totalorder %s26, %s40
      %p42 = scmp.eq.s32.totalorder %s21, 0
      %p43 = por %p41, %p42
      %s44 = ssub.s32 %s15, %s22
      %p45 = scmp.eq.s32.totalorder %s44, 0
      %s47 = sadd.s32 %s46, 1
      %s48 = scalar_select %p45, %s46, %s47
      %p51 = pneg %p45
      %p52 = scmp.eq.s32.totalorder %s15, 1
      %p53 = por %p51, %p52
      %p54 = scmp.ne.s32.totalorder %s46, %s49
      %p55 = scmp.eq.s32.totalorder %s15, 0
      %p56 = por %p54, %p55
      %p57 = scmp.ne.s32.totalorder %s46, %s49
      %p58 = scmp.eq.s32.totalorder %s20, 1
      %p59 = por %p57, %p58
      %p60 = scmp.ne.s32.totalorder %s49, %s50
      %p61 = scmp.eq.s32.totalorder %s20, 0
      %p62 = por %p60, %p61
      %p63 = scmp.ne.s32.totalorder %s49, %s50
      %p64 = scmp.eq.s32.totalorder %s21, 1
      %p65 = por %p63, %p64
      %p67 = scmp.ne.s32.totalorder %s50, %s66
      %p68 = scmp.eq.s32.totalorder %s21, 0
      %p69 = por %p67, %p68
      %s70 = ssub.s32 %s15, %s22
      %p71 = scmp.eq.s32.totalorder %s70, 0
      %s73 = sadd.s32 %s72, 1
      %s74 = scalar_select %p71, %s72, %s73
      %p77 = pneg %p71
      %p78 = scmp.eq.s32.totalorder %s15, 1
      %p79 = por %p77, %p78
      %p80 = scmp.ne.s32.totalorder %s72, %s75
      %p81 = scmp.eq.s32.totalorder %s15, 0
      %p82 = por %p80, %p81
      %p83 = scmp.ne.s32.totalorder %s72, %s75
      %p84 = scmp.eq.s32.totalorder %s20, 1
      %p85 = por %p83, %p84
      %p86 = scmp.ne.s32.totalorder %s75, %s76
      %p87 = scmp.eq.s32.totalorder %s20, 0
      %p88 = por %p86, %p87
      %p89 = scmp.ne.s32.totalorder %s75, %s76
      %p90 = scmp.eq.s32.totalorder %s21, 1
      %p91 = por %p89, %p90
      %p93 = scmp.ne.s32.totalorder %s76, %s92
      %p94 = scmp.eq.s32.totalorder %s21, 0
      %p95 = por %p93, %p94
      %p96 = scmp.le.s32.totalorder 1, %s15
      %p97 = scmp.lt.s32.totalorder %s15, 3
      %p98 = pnand %p96, %p97
      %p99 = pneg %p98
      // Predicated region
      $region9: #{tpu_custom_call.1} parent=5 // pred_check
        _
      $region10: #{tpu_custom_call.1} parent=5 // pred_check_branch
        %101 = sbr.rel (%p98) target = $region12
      $region11: #{tpu_custom_call.1} parent=5 // pred_region
        %s102 = ssub.s32 %s15, 1
        // Predicated region
        $region13: #{tpu_custom_call.1} parent=11 // pred_check
          %p103 = pneg %p36
        $region14: #{tpu_custom_call.1} parent=11 // pred_check_branch
          %105 = sbr.rel (%p103) target = $region16
        $region15: #{tpu_custom_call.1} parent=11 // pred_region
          %107 = vsyncadd [#allocation5], 0
          %s109 = sshll.u32 %s0, 4
          %s110 = int_to_ptr.hbm [resolvable:$true] %s109
          %112 = dma.hbm_to_smem %s110, 16, [#allocation2], [#allocation5]
        $region16: #{tpu_custom_call.1} parent=11 // pred_fallthru
          _
      $region12: #{tpu_custom_call.1} parent=5 // pred_fallthru
        _
      %p113 = scmp.lt.s32.totalorder %s15, 2
      // Predicated region
      $region17: #{tpu_custom_call.1} parent=5 // pred_check
        %p114 = pneg %p113
      $region18: #{tpu_custom_call.1} parent=5 // pred_check_branch
        %116 = sbr.rel (%p114) target = $region20
      $region19: #{tpu_custom_call.1} parent=5 // pred_region
        // Predicated region
        $region21: #{tpu_custom_call.1} parent=19 // pred_check
          %p117 = pneg %p56
        $region22: #{tpu_custom_call.1} parent=19 // pred_check_branch
          %119 = sbr.rel (%p117) target = $region24
        $region23: #{tpu_custom_call.1} parent=19 // pred_region
          %s120 = sand.u32 %s46, 1
          %s121 = scalar_lea.sflag [#allocation3], %s120
          %s122 = sand.u32 %s46, 1
          %s123 = smul.addr %s122, 72
          %s124 = scalar_lea.vmem [#allocation6], %s123
          %s125 = smul.u32 9, %s15
          %s126 = ssub.s32 17, %s125
          %p127 = scmp.lt.s32.totalorder %s126, 9
          %s128 = scalar_select %p127, %s126, 9
          %s129 = smul.u32 8, %s128
          %s130 = ssub.s32 72, %s129
          %s131 = sshll.u32 %s130, 4
          %132 = vsyncadd %s121, %s131
          %p133 = scmp.ne.s32.totalorder 0, %s129
          %s134 = smul.addr %s125, 8
          %s135 = scalar_lea.hbm %s1, %s134
          %s136 = smul.u32 %s128, 8
          %s137 = sshll.u32 %s136, 4
          %s138 = sshll.u32 %s135, 4
          %s139 = int_to_ptr.hbm [resolvable:$true] %s138
          %s140 = sshll.u32 %s124, 4
          %s141 = int_to_ptr.vmem [resolvable:$true] %s140
          %143 = dma.hbm_to_vmem [thread:$0]  (%p133), %s139, %s137, %s141, %s121
        $region24: #{tpu_custom_call.1} parent=19 // pred_fallthru
          _
      $region20: #{tpu_custom_call.1} parent=5 // pred_fallthru
        _
      %p144 = scmp.le.s32.totalorder 1, %s15
      %p145 = scmp.lt.s32.totalorder %s15, 3
      %p146 = pnand %p144, %p145
      %p147 = pneg %p146
      // Predicated region
      $region25: #{tpu_custom_call.1} parent=5 // pred_check
        _
      $region26: #{tpu_custom_call.1} parent=5 // pred_check_branch
        %149 = sbr.rel (%p146) target = $region28
      $region27: #{tpu_custom_call.1} parent=5 // pred_region
        %s150 = ssub.s32 %s15, 1
        // Predicated region
        $region29: #{tpu_custom_call.1} parent=27 // pred_check
          %p151 = pneg %p36
        $region30: #{tpu_custom_call.1} parent=27 // pred_check_branch
          %153 = sbr.rel (%p151) target = $region32
        $region31: #{tpu_custom_call.1} parent=27 // pred_region
          %155 = dma.done [#allocation5], 16
        $region32: #{tpu_custom_call.1} parent=27 // pred_fallthru
          _
        %s156 = sand.u32 %s49, 1
        %s157 = scalar_lea.sflag [#allocation3], %s156
        %s158 = sand.u32 %s49, 1
        %s159 = smul.addr %s158, 72
        %s160 = scalar_lea.vmem [#allocation6], %s159
        // Predicated region
        $region33: #{tpu_custom_call.1} parent=27 // pred_check
          %p161 = pneg %p62
        $region34: #{tpu_custom_call.1} parent=27 // pred_check_branch
          %163 = sbr.rel (%p161) target = $region36
        $region35: #{tpu_custom_call.1} parent=27 // pred_region
          %165 = dma.done %s157, 1152
        $region36: #{tpu_custom_call.1} parent=27 // pred_fallthru
          _
        %166 = sfence
        %p167 = pneg %p36
        %p168 = pneg %p33
        %s169 = sand.u32 %s49, 1
        %s170 = scalar_lea.sflag [#allocation3], %s169
        %s171 = sand.u32 %s49, 1
        %s172 = smul.addr %s171, 72
        %s173 = scalar_lea.vmem [#allocation6], %s172
        %p174 = pneg %p62
        %p175 = pneg %p59
        %p176 = pneg %p88
        %p177 = pneg %p85
        %s178 = sand.u32 %s75, 1
        %s179 = scalar_lea.sflag [#allocation4], %s178
        %s180 = sand.u32 %s75, 1
        %s181 = smul.addr %s180, 18
        %s182 = scalar_lea.vmem [#allocation7], %s181
        %s183 = smul.u32 9, %s20
        %s184 = ssub.s32 17, %s183
        %p185 = scmp.lt.s32.totalorder %s184, 9
        %s186 = scalar_select %p185, %s184, 9
        %s187 = smul.u32 8, %s186
        %s188 = smul.u32 9, %s20
        %s189 = ssub.s32 17, %s188
        %p190 = scmp.lt.s32.totalorder %s189, 9
        %s191 = scalar_select %p190, %s189, 9
        %s192 = smul.u32 2, %s191
        %v193 = vld [vmem:[%s160] sm:$0x7f]
        %v194 = vld [vmem:[%s160 + $0x8] sm:$0x7f]
        %v195 = vld [vmem:[%s160 + $0x10] sm:$0x7f]
        %v196 = vld [vmem:[%s160 + $0x18] sm:$0x7f]
        %v197 = vld [vmem:[%s160 + $0x20] sm:$0x7f]
        %v198 = vld [vmem:[%s160 + $0x28] sm:$0x7f]
        %v199 = vld [vmem:[%s160 + $0x30] sm:$0x7f]
        %v200 = vld [vmem:[%s160 + $0x38] sm:$0x7f]
        %v201 = vld [vmem:[%s160 + $0x40] sm:$0x7f]
        %s202 = sld [smem:[#allocation2]]
        %v203 = vstv %s202
        %v204 = vmul.f32 %v203, %v193
        %v205 = vmul.f32 %v203, %v194
        %v206 = vmul.f32 %v203, %v195
        %v207 = vmul.f32 %v203, %v196
        %v208 = vmul.f32 %v203, %v197
        %v209 = vmul.f32 %v203, %v198
        %v210 = vmul.f32 %v203, %v199
        %v211 = vmul.f32 %v203, %v200
        %v212 = vmul.f32 %v203, %v201
        %s213 = sld [smem:[#allocation2 + $0xe]]
        %v214 = vstv %s213
        %v215 = vadd.f32 %v204, %v214
        %v216 = vadd.f32 %v205, %v214
        %v217 = vadd.f32 %v206, %v214
        %v218 = vadd.f32 %v207, %v214
        %v219 = vadd.f32 %v208, %v214
        %v220 = vadd.f32 %v209, %v214
        %v221 = vadd.f32 %v210, %v214
        %v222 = vadd.f32 %v211, %v214
        %v223 = vadd.f32 %v212, %v214
        %s224 = sld [smem:[#allocation2 + $0x2]]
        %v225 = vstv %s224
        %v226 = vmul.f32 %v225, %v193
        %v227 = vmul.f32 %v225, %v194
        %v228 = vmul.f32 %v225, %v195
        %v229 = vmul.f32 %v225, %v196
        %v230 = vmul.f32 %v225, %v197
        %v231 = vmul.f32 %v225, %v198
        %v232 = vmul.f32 %v225, %v199
        %v233 = vmul.f32 %v225, %v200
        %v234 = vmul.f32 %v225, %v201
        %v244 = vrot.slane %v226, 1
        %v245 = vrot.slane %v227, 1
        %v246 = vrot.slane %v228, 1
        %v247 = vrot.slane %v229, 1
        %v248 = vrot.slane %v230, 1
        %v249 = vrot.slane %v231, 1
        %v250 = vrot.slane %v232, 1
        %v251 = vrot.slane %v233, 1
        %v252 = vrot.slane %v234, 1
        %v262 = vadd.f32 %v215, %v244
        %v263 = vadd.f32 %v216, %v245
        %v264 = vadd.f32 %v217, %v246
        %v265 = vadd.f32 %v218, %v247
        %v266 = vadd.f32 %v219, %v248
        %v267 = vadd.f32 %v220, %v249
        %v268 = vadd.f32 %v221, %v250
        %v269 = vadd.f32 %v222, %v251
        %v270 = vadd.f32 %v223, %v252
        %s271 = sld [smem:[#allocation2 + $0x4]]
        %v272 = vstv %s271
        %v273 = vmul.f32 %v272, %v193
        %v274 = vmul.f32 %v272, %v194
        %v275 = vmul.f32 %v272, %v195
        %v276 = vmul.f32 %v272, %v196
        %v277 = vmul.f32 %v272, %v197
        %v278 = vmul.f32 %v272, %v198
        %v279 = vmul.f32 %v272, %v199
        %v280 = vmul.f32 %v272, %v200
        %v281 = vmul.f32 %v272, %v201
        %v291 = vrot.slane %v273, 2
        %v292 = vrot.slane %v274, 2
        %v293 = vrot.slane %v275, 2
        %v294 = vrot.slane %v276, 2
        %v295 = vrot.slane %v277, 2
        %v296 = vrot.slane %v278, 2
        %v297 = vrot.slane %v279, 2
        %v298 = vrot.slane %v280, 2
        %v299 = vrot.slane %v281, 2
        %v309 = vadd.f32 %v262, %v291
        %v310 = vadd.f32 %v263, %v292
        %v311 = vadd.f32 %v264, %v293
        %v312 = vadd.f32 %v265, %v294
        %v313 = vadd.f32 %v266, %v295
        %v314 = vadd.f32 %v267, %v296
        %v315 = vadd.f32 %v268, %v297
        %v316 = vadd.f32 %v269, %v298
        %v317 = vadd.f32 %v270, %v299
        %s318 = sld [smem:[#allocation2 + $0x6]]
        %v319 = vstv %s318
        %v320 = vmul.f32 %v319, %v193
        %v321 = vmul.f32 %v319, %v194
        %v322 = vmul.f32 %v319, %v195
        %v323 = vmul.f32 %v319, %v196
        %v324 = vmul.f32 %v319, %v197
        %v325 = vmul.f32 %v319, %v198
        %v326 = vmul.f32 %v319, %v199
        %v327 = vmul.f32 %v319, %v200
        %v328 = vmul.f32 %v319, %v201
        %v338 = vrot.slane %v320, 3
        %v339 = vrot.slane %v321, 3
        %v340 = vrot.slane %v322, 3
        %v341 = vrot.slane %v323, 3
        %v342 = vrot.slane %v324, 3
        %v343 = vrot.slane %v325, 3
        %v344 = vrot.slane %v326, 3
        %v345 = vrot.slane %v327, 3
        %v346 = vrot.slane %v328, 3
        %v356 = vadd.f32 %v309, %v338
        %v357 = vadd.f32 %v310, %v339
        %v358 = vadd.f32 %v311, %v340
        %v359 = vadd.f32 %v312, %v341
        %v360 = vadd.f32 %v313, %v342
        %v361 = vadd.f32 %v314, %v343
        %v362 = vadd.f32 %v315, %v344
        %v363 = vadd.f32 %v316, %v345
        %v364 = vadd.f32 %v317, %v346
        %s365 = sld [smem:[#allocation2 + $0x8]]
        %v366 = vstv %s365
        %v367 = vmul.f32 %v366, %v193
        %v368 = vmul.f32 %v366, %v194
        %v369 = vmul.f32 %v366, %v195
        %v370 = vmul.f32 %v366, %v196
        %v371 = vmul.f32 %v366, %v197
        %v372 = vmul.f32 %v366, %v198
        %v373 = vmul.f32 %v366, %v199
        %v374 = vmul.f32 %v366, %v200
        %v375 = vmul.f32 %v366, %v201
        %v385 = vrot.slane %v367, 4
        %v386 = vrot.slane %v368, 4
        %v387 = vrot.slane %v369, 4
        %v388 = vrot.slane %v370, 4
        %v389 = vrot.slane %v371, 4
        %v390 = vrot.slane %v372, 4
        %v391 = vrot.slane %v373, 4
        %v392 = vrot.slane %v374, 4
        %v393 = vrot.slane %v375, 4
        %v403 = vadd.f32 %v356, %v385
        %v404 = vadd.f32 %v357, %v386
        %v405 = vadd.f32 %v358, %v387
        %v406 = vadd.f32 %v359, %v388
        %v407 = vadd.f32 %v360, %v389
        %v408 = vadd.f32 %v361, %v390
        %v409 = vadd.f32 %v362, %v391
        %v410 = vadd.f32 %v363, %v392
        %v411 = vadd.f32 %v364, %v393
        %s412 = sld [smem:[#allocation2 + $0xa]]
        %v413 = vstv %s412
        %v414 = vmul.f32 %v413, %v193
        %v415 = vmul.f32 %v413, %v194
        %v416 = vmul.f32 %v413, %v195
        %v417 = vmul.f32 %v413, %v196
        %v418 = vmul.f32 %v413, %v197
        %v419 = vmul.f32 %v413, %v198
        %v420 = vmul.f32 %v413, %v199
        %v421 = vmul.f32 %v413, %v200
        %v422 = vmul.f32 %v413, %v201
        %v432 = vrot.slane %v414, 5
        %v433 = vrot.slane %v415, 5
        %v434 = vrot.slane %v416, 5
        %v435 = vrot.slane %v417, 5
        %v436 = vrot.slane %v418, 5
        %v437 = vrot.slane %v419, 5
        %v438 = vrot.slane %v420, 5
        %v439 = vrot.slane %v421, 5
        %v440 = vrot.slane %v422, 5
        %v450 = vadd.f32 %v403, %v432
        %v451 = vadd.f32 %v404, %v433
        %v452 = vadd.f32 %v405, %v434
        %v453 = vadd.f32 %v406, %v435
        %v454 = vadd.f32 %v407, %v436
        %v455 = vadd.f32 %v408, %v437
        %v456 = vadd.f32 %v409, %v438
        %v457 = vadd.f32 %v410, %v439
        %v458 = vadd.f32 %v411, %v440
        %s459 = sld [smem:[#allocation2 + $0xc]]
        %v460 = vstv %s459
        %v461 = vmul.f32 %v460, %v193
        %v462 = vmul.f32 %v460, %v194
        %v463 = vmul.f32 %v460, %v195
        %v464 = vmul.f32 %v460, %v196
        %v465 = vmul.f32 %v460, %v197
        %v466 = vmul.f32 %v460, %v198
        %v467 = vmul.f32 %v460, %v199
        %v468 = vmul.f32 %v460, %v200
        %v469 = vmul.f32 %v460, %v201
        %v479 = vrot.slane %v461, 6
        %v480 = vrot.slane %v462, 6
        %v481 = vrot.slane %v463, 6
        %v482 = vrot.slane %v464, 6
        %v483 = vrot.slane %v465, 6
        %v484 = vrot.slane %v466, 6
        %v485 = vrot.slane %v467, 6
        %v486 = vrot.slane %v468, 6
        %v487 = vrot.slane %v469, 6
        %v497 = vadd.f32 %v450, %v479
        %v498 = vadd.f32 %v451, %v480
        %v499 = vadd.f32 %v452, %v481
        %v500 = vadd.f32 %v453, %v482
        %v501 = vadd.f32 %v454, %v483
        %v502 = vadd.f32 %v455, %v484
        %v503 = vadd.f32 %v456, %v485
        %v504 = vadd.f32 %v457, %v486
        %v505 = vadd.f32 %v458, %v487
        %v506 = vtanh.pop %v497
        %v507 = vtanh.pop %v498
        %v508 = vtanh.pop %v499
        %v509 = vtanh.pop %v500
        %v510 = vtanh.pop %v501
        %v511 = vtanh.pop %v502
        %v512 = vtanh.pop %v503
        %v513 = vtanh.pop %v504
        %v514 = vtanh.pop %v505
        %v523 = vrot.slane %v507, 7
        %v524 = vrot.slane %v508, 6
        %v525 = vrot.slane %v509, 5
        %v526 = vrot.slane %v510, 4
        %v527 = vrot.slane %v511, 3
        %v528 = vrot.slane %v512, 2
        %v529 = vrot.slane %v513, 1
        %vm530 = vcmask 1040384
        %v531 = vsel %vm530, %v506, %v523
        %vm532 = vcmask 1042434
        %v533 = vsel %vm532, %v524, %v525
        %vm534 = vcmask 1041408
        %v535 = vsel %vm534, %v531, %v533
        %vm536 = vcmask 1044484
        %v537 = vsel %vm536, %v526, %v527
        %vm538 = vcmask 1046534
        %v539 = vsel %vm538, %v528, %v529
        %vm540 = vcmask 1045508
        %v541 = vsel %vm540, %v537, %v539
        %vm542 = vcmask 1043456
        %v543 = vsel %vm542, %v535, %v541
        %545 = vst [vmem:[%s182] ss:$2 sm:$0xff] %v543
        %v546 = vlaneseq
        %vm547 = vcmp.ge.s32.totalorder %v546, 0
        %vm548 = vcmp.lt.s32.totalorder %v546, 128
        %vm549 = vmand %vm547, %vm548
        %s550 = scalar_lea.vmem %s182, 16 [#allocation7]
        %551 = vst.msk [vmem:[%s550] ss:$2 sm:$0x1] %vm549, %v514
        %s552 = sld [smem:[#allocation2 + $0x1]]
        %v553 = vstv %s552
        %v554 = vmul.f32 %v553, %v193
        %v555 = vmul.f32 %v553, %v194
        %v556 = vmul.f32 %v553, %v195
        %v557 = vmul.f32 %v553, %v196
        %v558 = vmul.f32 %v553, %v197
        %v559 = vmul.f32 %v553, %v198
        %v560 = vmul.f32 %v553, %v199
        %v561 = vmul.f32 %v553, %v200
        %v562 = vmul.f32 %v553, %v201
        %s563 = sld [smem:[#allocation2 + $0xf]]
        %v564 = vstv %s563
        %v565 = vadd.f32 %v554, %v564
        %v566 = vadd.f32 %v555, %v564
        %v567 = vadd.f32 %v556, %v564
        %v568 = vadd.f32 %v557, %v564
        %v569 = vadd.f32 %v558, %v564
        %v570 = vadd.f32 %v559, %v564
        %v571 = vadd.f32 %v560, %v564
        %v572 = vadd.f32 %v561, %v564
        %v573 = vadd.f32 %v562, %v564
        %s574 = sld [smem:[#allocation2 + $0x3]]
        %v575 = vstv %s574
        %v576 = vmul.f32 %v575, %v193
        %v577 = vmul.f32 %v575, %v194
        %v578 = vmul.f32 %v575, %v195
        %v579 = vmul.f32 %v575, %v196
        %v580 = vmul.f32 %v575, %v197
        %v581 = vmul.f32 %v575, %v198
        %v582 = vmul.f32 %v575, %v199
        %v583 = vmul.f32 %v575, %v200
        %v584 = vmul.f32 %v575, %v201
        %v594 = vrot.slane %v576, 1
        %v595 = vrot.slane %v577, 1
        %v596 = vrot.slane %v578, 1
        %v597 = vrot.slane %v579, 1
        %v598 = vrot.slane %v580, 1
        %v599 = vrot.slane %v581, 1
        %v600 = vrot.slane %v582, 1
        %v601 = vrot.slane %v583, 1
        %v602 = vrot.slane %v584, 1
        %v612 = vadd.f32 %v565, %v594
        %v613 = vadd.f32 %v566, %v595
        %v614 = vadd.f32 %v567, %v596
        %v615 = vadd.f32 %v568, %v597
        %v616 = vadd.f32 %v569, %v598
        %v617 = vadd.f32 %v570, %v599
        %v618 = vadd.f32 %v571, %v600
        %v619 = vadd.f32 %v572, %v601
        %v620 = vadd.f32 %v573, %v602
        %s621 = sld [smem:[#allocation2 + $0x5]]
        %v622 = vstv %s621
        %v623 = vmul.f32 %v622, %v193
        %v624 = vmul.f32 %v622, %v194
        %v625 = vmul.f32 %v622, %v195
        %v626 = vmul.f32 %v622, %v196
        %v627 = vmul.f32 %v622, %v197
        %v628 = vmul.f32 %v622, %v198
        %v629 = vmul.f32 %v622, %v199
        %v630 = vmul.f32 %v622, %v200
        %v631 = vmul.f32 %v622, %v201
        %v641 = vrot.slane %v623, 2
        %v642 = vrot.slane %v624, 2
        %v643 = vrot.slane %v625, 2
        %v644 = vrot.slane %v626, 2
        %v645 = vrot.slane %v627, 2
        %v646 = vrot.slane %v628, 2
        %v647 = vrot.slane %v629, 2
        %v648 = vrot.slane %v630, 2
        %v649 = vrot.slane %v631, 2
        %v659 = vadd.f32 %v612, %v641
        %v660 = vadd.f32 %v613, %v642
        %v661 = vadd.f32 %v614, %v643
        %v662 = vadd.f32 %v615, %v644
        %v663 = vadd.f32 %v616, %v645
        %v664 = vadd.f32 %v617, %v646
        %v665 = vadd.f32 %v618, %v647
        %v666 = vadd.f32 %v619, %v648
        %v667 = vadd.f32 %v620, %v649
        %s668 = sld [smem:[#allocation2 + $0x7]]
        %v669 = vstv %s668
        %v670 = vmul.f32 %v669, %v193
        %v671 = vmul.f32 %v669, %v194
        %v672 = vmul.f32 %v669, %v195
        %v673 = vmul.f32 %v669, %v196
        %v674 = vmul.f32 %v669, %v197
        %v675 = vmul.f32 %v669, %v198
        %v676 = vmul.f32 %v669, %v199
        %v677 = vmul.f32 %v669, %v200
        %v678 = vmul.f32 %v669, %v201
        %v688 = vrot.slane %v670, 3
        %v689 = vrot.slane %v671, 3
        %v690 = vrot.slane %v672, 3
        %v691 = vrot.slane %v673, 3
        %v692 = vrot.slane %v674, 3
        %v693 = vrot.slane %v675, 3
        %v694 = vrot.slane %v676, 3
        %v695 = vrot.slane %v677, 3
        %v696 = vrot.slane %v678, 3
        %v706 = vadd.f32 %v659, %v688
        %v707 = vadd.f32 %v660, %v689
        %v708 = vadd.f32 %v661, %v690
        %v709 = vadd.f32 %v662, %v691
        %v710 = vadd.f32 %v663, %v692
        %v711 = vadd.f32 %v664, %v693
        %v712 = vadd.f32 %v665, %v694
        %v713 = vadd.f32 %v666, %v695
        %v714 = vadd.f32 %v667, %v696
        %s715 = sld [smem:[#allocation2 + $0x9]]
        %v716 = vstv %s715
        %v717 = vmul.f32 %v716, %v193
        %v718 = vmul.f32 %v716, %v194
        %v719 = vmul.f32 %v716, %v195
        %v720 = vmul.f32 %v716, %v196
        %v721 = vmul.f32 %v716, %v197
        %v722 = vmul.f32 %v716, %v198
        %v723 = vmul.f32 %v716, %v199
        %v724 = vmul.f32 %v716, %v200
        %v725 = vmul.f32 %v716, %v201
        %v735 = vrot.slane %v717, 4
        %v736 = vrot.slane %v718, 4
        %v737 = vrot.slane %v719, 4
        %v738 = vrot.slane %v720, 4
        %v739 = vrot.slane %v721, 4
        %v740 = vrot.slane %v722, 4
        %v741 = vrot.slane %v723, 4
        %v742 = vrot.slane %v724, 4
        %v743 = vrot.slane %v725, 4
        %v753 = vadd.f32 %v706, %v735
        %v754 = vadd.f32 %v707, %v736
        %v755 = vadd.f32 %v708, %v737
        %v756 = vadd.f32 %v709, %v738
        %v757 = vadd.f32 %v710, %v739
        %v758 = vadd.f32 %v711, %v740
        %v759 = vadd.f32 %v712, %v741
        %v760 = vadd.f32 %v713, %v742
        %v761 = vadd.f32 %v714, %v743
        %s762 = sld [smem:[#allocation2 + $0xb]]
        %v763 = vstv %s762
        %v764 = vmul.f32 %v763, %v193
        %v765 = vmul.f32 %v763, %v194
        %v766 = vmul.f32 %v763, %v195
        %v767 = vmul.f32 %v763, %v196
        %v768 = vmul.f32 %v763, %v197
        %v769 = vmul.f32 %v763, %v198
        %v770 = vmul.f32 %v763, %v199
        %v771 = vmul.f32 %v763, %v200
        %v772 = vmul.f32 %v763, %v201
        %v782 = vrot.slane %v764, 5
        %v783 = vrot.slane %v765, 5
        %v784 = vrot.slane %v766, 5
        %v785 = vrot.slane %v767, 5
        %v786 = vrot.slane %v768, 5
        %v787 = vrot.slane %v769, 5
        %v788 = vrot.slane %v770, 5
        %v789 = vrot.slane %v771, 5
        %v790 = vrot.slane %v772, 5
        %v800 = vadd.f32 %v753, %v782
        %v801 = vadd.f32 %v754, %v783
        %v802 = vadd.f32 %v755, %v784
        %v803 = vadd.f32 %v756, %v785
        %v804 = vadd.f32 %v757, %v786
        %v805 = vadd.f32 %v758, %v787
        %v806 = vadd.f32 %v759, %v788
        %v807 = vadd.f32 %v760, %v789
        %v808 = vadd.f32 %v761, %v790
        %s809 = sld [smem:[#allocation2 + $0xd]]
        %v810 = vstv %s809
        %v811 = vmul.f32 %v810, %v193
        %v812 = vmul.f32 %v810, %v194
        %v813 = vmul.f32 %v810, %v195
        %v814 = vmul.f32 %v810, %v196
        %v815 = vmul.f32 %v810, %v197
        %v816 = vmul.f32 %v810, %v198
        %v817 = vmul.f32 %v810, %v199
        %v818 = vmul.f32 %v810, %v200
        %v819 = vmul.f32 %v810, %v201
        %v829 = vrot.slane %v811, 6
        %v830 = vrot.slane %v812, 6
        %v831 = vrot.slane %v813, 6
        %v832 = vrot.slane %v814, 6
        %v833 = vrot.slane %v815, 6
        %v834 = vrot.slane %v816, 6
        %v835 = vrot.slane %v817, 6
        %v836 = vrot.slane %v818, 6
        %v837 = vrot.slane %v819, 6
        %v847 = vadd.f32 %v800, %v829
        %v848 = vadd.f32 %v801, %v830
        %v849 = vadd.f32 %v802, %v831
        %v850 = vadd.f32 %v803, %v832
        %v851 = vadd.f32 %v804, %v833
        %v852 = vadd.f32 %v805, %v834
        %v853 = vadd.f32 %v806, %v835
        %v854 = vadd.f32 %v807, %v836
        %v855 = vadd.f32 %v808, %v837
        %v856 = vtanh.pop %v847
        %v857 = vtanh.pop %v848
        %v858 = vtanh.pop %v849
        %v859 = vtanh.pop %v850
        %v860 = vtanh.pop %v851
        %v861 = vtanh.pop %v852
        %v862 = vtanh.pop %v853
        %v863 = vtanh.pop %v854
        %v864 = vtanh.pop %v855
        %v873 = vrot.slane %v857, 7
        %v874 = vrot.slane %v858, 6
        %v875 = vrot.slane %v859, 5
        %v876 = vrot.slane %v860, 4
        %v877 = vrot.slane %v861, 3
        %v878 = vrot.slane %v862, 2
        %v879 = vrot.slane %v863, 1
        %v880 = vsel %vm530, %v856, %v873
        %v881 = vsel %vm532, %v874, %v875
        %v882 = vsel %vm534, %v880, %v881
        %v883 = vsel %vm536, %v876, %v877
        %v884 = vsel %vm538, %v878, %v879
        %v885 = vsel %vm540, %v883, %v884
        %v886 = vsel %vm542, %v882, %v885
        %s888 = scalar_lea.vmem %s182, 1 [#allocation7]
        %889 = vst [vmem:[%s888] ss:$2 sm:$0xff] %v886
        %s890 = scalar_lea.vmem %s182, 17 [#allocation7]
        %891 = vst.msk [vmem:[%s890] ss:$2 sm:$0x1] %vm549, %v864
        %s892 = sand.u32 %s75, 1
        %s893 = scalar_lea.sflag [#allocation4], %s892
        %s894 = sand.u32 %s75, 1
        %s895 = smul.addr %s894, 18
        %s896 = scalar_lea.vmem [#allocation7], %s895
        // Predicated region
        $region37: #{tpu_custom_call.1} parent=27 // pred_check
          %p897 = pneg %p85
        $region38: #{tpu_custom_call.1} parent=27 // pred_check_branch
          %899 = sbr.rel (%p897) target = $region40
        $region39: #{tpu_custom_call.1} parent=27 // pred_region
          %s900 = smul.u32 9, %s20
          %s901 = ssub.s32 17, %s900
          %p902 = scmp.lt.s32.totalorder %s901, 9
          %s903 = scalar_select %p902, %s901, 9
          %s904 = smul.u32 2, %s903
          %s905 = ssub.s32 18, %s904
          %s906 = sshll.u32 %s905, 4
          %907 = vsyncadd %s893, %s906
          %p908 = scmp.ne.s32.totalorder 0, %s904
          %s909 = smul.addr %s900, 2
          %s910 = scalar_lea.hbm %s2, %s909
          %s911 = smul.u32 %s903, 2
          %s912 = sshll.u32 %s911, 4
          %s913 = sshll.u32 %s896, 4
          %s914 = int_to_ptr.vmem [resolvable:$true] %s913
          %s915 = sshll.u32 %s910, 4
          %s916 = int_to_ptr.hbm [resolvable:$true] %s915
          %918 = dma.vmem_to_hbm [thread:$0]  (%p908), %s914, %s912, %s916, %s893
        $region40: #{tpu_custom_call.1} parent=27 // pred_fallthru
          _
      $region28: #{tpu_custom_call.1} parent=5 // pred_fallthru
        _
      %p919 = scmp.le.s32.totalorder 2, %s15
      // Predicated region
      $region41: #{tpu_custom_call.1} parent=5 // pred_check
        %p920 = pneg %p919
      $region42: #{tpu_custom_call.1} parent=5 // pred_check_branch
        %922 = sbr.rel (%p920) target = $region44
      $region43: #{tpu_custom_call.1} parent=5 // pred_region
        %s923 = ssub.s32 %s15, 2
        // Predicated region
        $region45: #{tpu_custom_call.1} parent=43 // pred_check
          %p924 = pneg %p91
        $region46: #{tpu_custom_call.1} parent=43 // pred_check_branch
          %926 = sbr.rel (%p924) target = $region48
        $region47: #{tpu_custom_call.1} parent=43 // pred_region
          %s927 = sand.u32 %s76, 1
          %s928 = scalar_lea.sflag [#allocation4], %s927
          %s929 = sand.u32 %s76, 1
          %s930 = smul.addr %s929, 18
          %s931 = scalar_lea.vmem [#allocation7], %s930
          %933 = dma.done %s928, 288
        $region48: #{tpu_custom_call.1} parent=43 // pred_fallthru
          _
      $region44: #{tpu_custom_call.1} parent=5 // pred_fallthru
        _
    $region6: #{tpu_custom_call.1} parent=1 // loop_footer
      %s19 = sadd.s32 1, %s15
    $region7: #{tpu_custom_call.1} parent=1 // loop_footer_branch
      %14 = sbr.rel target = $region3
    $region8: #{tpu_custom_call.1} parent=1 // loop_exit
      _
    %934 = vsyncpa [#allocation3], 1
    %s935 = scalar_lea.sflag [#allocation3], 1
    %936 = vsyncpa %s935, 1
    %937 = vsyncpa [#allocation4], 1
    %s938 = scalar_lea.sflag [#allocation4], 1
    %939 = vsyncpa %s938, 1
    %940 = vsyncpa [#allocation5], 1
    %s941 = scalar_lea.sflag [#allocation5], 1
    %942 = vsyncpa %s941, 1

</llo_original>
